<compile_context>
chip_gen: v7x
topology: tpu7x:2x2x1
jax: 0.10.0
libtpu: 0.0.40
codegen_flags: <defaults>
</compile_context>

<pallas_src>
import functools

import jax
import jax.numpy as jnp
from jax import lax
from jax.experimental import pallas as pl
from jax.experimental.pallas import tpu as pltpu


def _contrastive_kernel(img_ref, txt_ref, out_ref,
                        acc_ref, img_n, m_row, l_row, m_col, l_col,
                        *, B, inv_temp, tq, tk, nq, nk, needs_mask):
    qi = pl.program_id(0)   # row (image) tile index   -- outer
    ki = pl.program_id(1)   # column (text) tile index -- inner (row reduction)

    @pl.when((qi == 0) & (ki == 0))
    def _init_acc():
        acc_ref[0] = jnp.float32(0.0)

    eps2 = jnp.float32(1e-24)  # == (F.normalize eps = 1e-12) ** 2

    # ---- image tile: L2-normalize (rsqrt on EUP), fold 1/T in, cast to bf16.
    # Done once per row-tile and cached in VMEM; reused for every inner ki step.
    @pl.when(ki == 0)
    def _prep_img():
        img = img_ref[...].astype(jnp.float32)
        img_scale = lax.rsqrt(
            jnp.maximum(jnp.sum(img * img, axis=1, keepdims=True), eps2))
        img_n[...] = (img * (img_scale * jnp.float32(inv_temp))).astype(jnp.bfloat16)

    img_bf = img_n[...]

    # ---- text tile: normalized fresh each step (this block changes every step).
    txt = txt_ref[...].astype(jnp.float32)
    txt_scale = lax.rsqrt(
        jnp.maximum(jnp.sum(txt * txt, axis=1, keepdims=True), eps2))
    txt_bf = (txt * txt_scale).astype(jnp.bfloat16)

    # (tq, tk) logits tile on the MXU; contraction over the feature dim of BOTH
    # operands, so no transposed copy of the text features is ever materialized.
    s = lax.dot_general(img_bf, txt_bf, (((1,), (1,)), ((), ())),
                        preferred_element_type=jnp.float32)

    if needs_mask:
        neg = jnp.float32(-1e30)
        row_valid = (qi * tq + lax.broadcasted_iota(jnp.int32, (tq, 1), 0)) < B
        col_valid = (ki * tk + lax.broadcasted_iota(jnp.int32, (1, tk), 1)) < B
        s_row = jnp.where(col_valid, s, neg)   # image->text: LSE over columns
        s_col = jnp.where(row_valid, s, neg)   # text->image: LSE over rows
    else:
        row_valid = col_valid = None
        s_row = s_col = s

    # ---------------- image -> text: online LSE over column tiles ----------------
    @pl.when(ki == 0)
    def _init_row():
        m_row[...] = jnp.full_like(m_row, -1e30)
        l_row[...] = jnp.zeros_like(l_row)

    m_prev = m_row[...]
    m_new = jnp.maximum(m_prev, jnp.max(s_row, axis=1, keepdims=True))
    l_row[...] = (jnp.exp(m_prev - m_new) * l_row[...]
                  + jnp.sum(jnp.exp(s_row - m_new), axis=1, keepdims=True))
    m_row[...] = m_new

    # ---------------- text -> image: online LSE over row tiles -------------------
    @pl.when(qi == 0)
    def _init_col():
        m_col[ki] = jnp.full((1, tk), -1e30, jnp.float32)
        l_col[ki] = jnp.zeros((1, tk), jnp.float32)

    mc_prev = m_col[ki]
    mc_new = jnp.maximum(mc_prev, jnp.max(s_col, axis=0, keepdims=True))
    l_col[ki] = (jnp.exp(mc_prev - mc_new) * l_col[ki]
                 + jnp.sum(jnp.exp(s_col - mc_new), axis=0, keepdims=True))
    m_col[ki] = mc_new

    # ---------------- diagonal (positive pair) term straight from features -------
    @pl.when(qi == ki)
    def _diag():
        d = jnp.sum(img_bf.astype(jnp.float32) * txt_bf.astype(jnp.float32),
                    axis=1, keepdims=True)              # == diag of this s tile
        d_m = jnp.where(row_valid, d, 0.0) if needs_mask else d
        acc_ref[0] = acc_ref[0] - 2.0 * jnp.sum(d_m)    # diag appears in both CE dirs

    # ---------------- finalize row direction for this row tile -------------------
    @pl.when(ki == nk - 1)
    def _fin_row():
        lse = m_row[...] + jnp.log(l_row[...])
        if needs_mask:
            lse = jnp.where(row_valid, lse, 0.0)
        acc_ref[0] = acc_ref[0] + jnp.sum(lse)

    # ---------------- finalize column direction for this column tile -------------
    @pl.when(qi == nq - 1)
    def _fin_col():
        lse_c = m_col[ki] + jnp.log(l_col[ki])
        if needs_mask:
            lse_c = jnp.where(col_valid, lse_c, 0.0)
        acc_ref[0] = acc_ref[0] + jnp.sum(lse_c)

    # ---------------- write the scalar loss at the very last grid step -----------
    @pl.when((qi == nq - 1) & (ki == nk - 1))
    def _out():
        out_ref[0] = acc_ref[0] / jnp.float32(B)


def contrastive_loss(image_features, text_features, temperature=0.1, *, block=None):
    B, D = image_features.shape
    assert text_features.shape == (B, D)

    if block is None:
        # Biggest-tile-that-fits heuristic: a single exact (B, B) tile avoids
        # padding, masking and all online-LSE redundancy whenever the working
        # set (double-buffered f32 inputs + bf16 copies + f32 logits tile)
        # comfortably fits the default scoped-VMEM limit; otherwise fall back
        # to 128-wide MXU tiles.
        working = 4 * B * D * 4 + 2 * B * D * 2 + B * B * 4
        block = B if (B <= 2048 and working <= 12 * 1024 * 1024) else 128

    if B <= block:
        tq = tk = int(B)                              # single exact full-dim tile
    else:
        tq = tk = max(8, (int(block) // 8) * 8)       # multi-tile: sublane multiple
    nq = nk = int(pl.cdiv(B, tq))
    B_pad = nq * tq
    needs_mask = (B_pad != B)
    if needs_mask:
        pad = ((0, B_pad - B), (0, 0))
        image_features = jnp.pad(image_features, pad)
        text_features = jnp.pad(text_features, pad)

    kernel = functools.partial(
        _contrastive_kernel,
        B=B, inv_temp=1.0 / float(temperature),
        tq=tq, tk=tk, nq=nq, nk=nk, needs_mask=needs_mask)

    itemsize = jnp.dtype(image_features.dtype).itemsize
    cost = pl.CostEstimate(
        flops=2 * B_pad * B_pad * D + 8 * B_pad * D * (nq + 1),
        transcendentals=2 * B_pad * B_pad + 4 * B_pad,
        # image matrix read once (block index only depends on qi), text read nq x.
        bytes_accessed=(nq + 1) * B_pad * D * itemsize + 4,
    )

    out = pl.pallas_call(
        kernel,
        out_shape=jax.ShapeDtypeStruct((1,), jnp.float32),
        grid_spec=pltpu.PrefetchScalarGridSpec(
            num_scalar_prefetch=0,
            grid=(nq, nk),
            in_specs=[
                pl.BlockSpec((tq, D), lambda qi, ki: (qi, 0)),   # image row tile
                pl.BlockSpec((tk, D), lambda qi, ki: (ki, 0)),   # text  col tile
            ],
            out_specs=pl.BlockSpec(memory_space=pltpu.SMEM),
            scratch_shapes=[
                pltpu.SMEM((1,), jnp.float32),            # scalar loss accumulator
                pltpu.VMEM((tq, D), jnp.bfloat16),        # cached normalized image tile
                pltpu.VMEM((tq, 1), jnp.float32),         # m_row (image->text max)
                pltpu.VMEM((tq, 1), jnp.float32),         # l_row (image->text sum-exp)
                pltpu.VMEM((nk, 1, tk), jnp.float32),     # m_col (text->image max)
                pltpu.VMEM((nk, 1, tk), jnp.float32),     # l_col (text->image sum-exp)
            ],
        ),
        compiler_params=pltpu.CompilerParams(
            # TODO(synk): both axes must stay "arbitrary" because the single scalar
            # accumulator and the column-direction stats span the whole grid;
            # dual-TensorCore (v7x) sharding would need per-core partial outputs
            # merged outside the kernel.
            dimension_semantics=("arbitrary", "arbitrary"),
        ),
        cost_estimate=cost,
    )(image_features, text_features)
    return out[0]


def _reference(image_features, text_features, temperature=0.1, *, mxu_bf16=False):
    """Pure-JAX reference matching the PyTorch module (optionally with the same
    bf16 rounding of the MXU operands that the kernel applies)."""
    x = image_features.astype(jnp.float32)
    y = text_features.astype(jnp.float32)
    xn = x / jnp.maximum(jnp.linalg.norm(x, axis=1, keepdims=True), 1e-12)
    yn = y / jnp.maximum(jnp.linalg.norm(y, axis=1, keepdims=True), 1e-12)
    xn = xn / temperature
    if mxu_bf16:
        xn = xn.astype(jnp.bfloat16).astype(jnp.float32)
        yn = yn.astype(jnp.bfloat16).astype(jnp.float32)
    logits = xn @ yn.T

    def ce(lg):
        lse = jax.scipy.special.logsumexp(lg, axis=1)
        return jnp.mean(lse - jnp.diagonal(lg))

    return ce(logits) + ce(logits.T)


if __name__ == "__main__":
    key = jax.random.PRNGKey(0)
    k1, k2, k3, k4 = jax.random.split(key, 4)

    # Case 1: small batch -> single exact tile (no padding / masking).
    B1, D1 = 8, 32
    img1 = jax.random.normal(k1, (B1, D1), dtype=jnp.float32)
    txt1 = jax.random.normal(k2, (B1, D1), dtype=jnp.float32)
    out1 = jax.block_until_ready(contrastive_loss(img1, txt1, temperature=0.1))
    ref1_bf = _reference(img1, txt1, 0.1, mxu_bf16=True)
    ref1_f32 = _reference(img1, txt1, 0.1, mxu_bf16=False)
    assert jnp.allclose(out1, ref1_bf, rtol=3e-3, atol=3e-3), (out1, ref1_bf)
    assert jnp.allclose(out1, ref1_f32, rtol=5e-2, atol=5e-2), (out1, ref1_f32)

    # Case 2: same data through both code paths:
    #   (a) auto single-tile (B=200 fits VMEM -> one exact (200,200) tile),
    #   (b) forced 128-wide multi-tile grid -> padding + masking + online LSE.
    B2, D2 = 200, 96
    img2 = jax.random.normal(k3, (B2, D2), dtype=jnp.float32)
    txt2 = jax.random.normal(k4, (B2, D2), dtype=jnp.float32)
    ref2_bf = _reference(img2, txt2, 0.1, mxu_bf16=True)
    ref2_f32 = _reference(img2, txt2, 0.1, mxu_bf16=False)

    out2a = jax.block_until_ready(contrastive_loss(img2, txt2, temperature=0.1))
    out2b = jax.block_until_ready(
        contrastive_loss(img2, txt2, temperature=0.1, block=128))
    for o in (out2a, out2b):
        assert jnp.allclose(o, ref2_bf, rtol=3e-3, atol=3e-3), (o, ref2_bf)
        assert jnp.allclose(o, ref2_f32, rtol=5e-2, atol=5e-2), (o, ref2_f32)

    print("KERNEL_OK")
</pallas_src>

<mosaic_0001>
module attributes {stable_mosaic.version = 11 : i64} {
  func.func @_contrastive_kernel(%arg0: i32, %arg1: i32, %arg2: memref<8x32xf32, #tpu.memory_space<vmem>>, %arg3: memref<8x32xf32, #tpu.memory_space<vmem>>, %arg4: memref<1xf32, #tpu.memory_space<smem>>, %arg5: memref<1xf32, #tpu.memory_space<smem>>, %arg6: memref<8x32xbf16, #tpu.memory_space<vmem>>, %arg7: memref<8x1xf32, #tpu.memory_space<vmem>>, %arg8: memref<8x1xf32, #tpu.memory_space<vmem>>, %arg9: memref<1x1x8xf32, #tpu.memory_space<vmem>>, %arg10: memref<1x1x8xf32, #tpu.memory_space<vmem>>) attributes {dimension_semantics = [#tpu.dimension_semantics<arbitrary>, #tpu.dimension_semantics<arbitrary>], iteration_bounds = array<i64: 1, 1>, scalar_prefetch = 0 : i64, scratch_operands = 6 : i64, tpu.core_type = #tpu.core_type<tc>, window_params = [{transform_indices = @transform_0, window_bounds = array<i64: 8, 32>}, {transform_indices = @transform_1, window_bounds = array<i64: 8, 32>}, {transform_indices = @transform_2, window_bounds = array<i64: 1>}]} {
    %c0_i32 = arith.constant 0 : i32
    %0 = arith.cmpi eq, %arg0, %c0_i32 : i32
    %c0_i32_0 = arith.constant 0 : i32
    %1 = arith.cmpi eq, %arg1, %c0_i32_0 : i32
    %2 = arith.andi %0, %1 : i1
    %3 = arith.extui %2 : i1 to i32
    %c0_i32_1 = arith.constant 0 : i32
    %4 = arith.cmpi ne, %3, %c0_i32_1 : i32
    scf.if %4 {
      %cst_42 = arith.constant 0.000000e+00 : f32
      %c0_43 = arith.constant 0 : index
      %82 = memref.load %arg5[%c0_43] : memref<1xf32, #tpu.memory_space<smem>>
      memref.store %cst_42, %arg5[%c0_43] : memref<1xf32, #tpu.memory_space<smem>>
    } else {
    }
    %c0_i32_2 = arith.constant 0 : i32
    %5 = arith.cmpi eq, %arg1, %c0_i32_2 : i32
    %6 = arith.extui %5 : i1 to i32
    %cst = arith.constant 1.000000e-24 : f32
    %c0_i32_3 = arith.constant 0 : i32
    %7 = arith.cmpi ne, %6, %c0_i32_3 : i32
    scf.if %7 {
      %c0_42 = arith.constant 0 : index
      %c0_43 = arith.constant 0 : index
      %82 = vector.load %arg2[%c0_42, %c0_43] : memref<8x32xf32, #tpu.memory_space<vmem>>, vector<8x32xf32>
      %83 = arith.mulf %82, %82 : vector<8x32xf32>
      %cst_44 = arith.constant dense<0.000000e+00> : vector<8xf32>
      %84 = vector.multi_reduction <add>, %83, %cst_44 [1] : vector<8x32xf32> to vector<8xf32>
      %85 = vector.shape_cast %84 : vector<8xf32> to vector<8x1xf32>
      %86 = vector.broadcast %cst : f32 to vector<8x1xf32>
      %87 = arith.maximumf %85, %86 : vector<8x1xf32>
      %88 = math.rsqrt %87 : vector<8x1xf32>
      %cst_45 = arith.constant 1.000000e+01 : f32
      %89 = vector.broadcast %cst_45 : f32 to vector<8x1xf32>
      %90 = arith.mulf %88, %89 : vector<8x1xf32>
      %91 = vector.broadcast %90 : vector<8x1xf32> to vector<8x32xf32>
      %92 = arith.mulf %82, %91 : vector<8x32xf32>
      %93 = arith.truncf %92 : vector<8x32xf32> to vector<8x32xbf16>
      %c0_46 = arith.constant 0 : index
      %c0_47 = arith.constant 0 : index
      %94 = vector.load %arg6[%c0_46, %c0_47] : memref<8x32xbf16, #tpu.memory_space<vmem>>, vector<8x32xbf16>
      tpu.vector_store %arg6[%c0_46, %c0_47], %93 {strides = array<i32>} : memref<8x32xbf16, #tpu.memory_space<vmem>>, vector<8x32xbf16>,
    } else {
    }
    %c0 = arith.constant 0 : index
    %c0_4 = arith.constant 0 : index
    %8 = vector.load %arg6[%c0, %c0_4] : memref<8x32xbf16, #tpu.memory_space<vmem>>, vector<8x32xbf16>
    %c0_5 = arith.constant 0 : index
    %c0_6 = arith.constant 0 : index
    %9 = vector.load %arg3[%c0_5, %c0_6] : memref<8x32xf32, #tpu.memory_space<vmem>>, vector<8x32xf32>
    %10 = arith.mulf %9, %9 : vector<8x32xf32>
    %cst_7 = arith.constant dense<0.000000e+00> : vector<8xf32>
    %11 = vector.multi_reduction <add>, %10, %cst_7 [1] : vector<8x32xf32> to vector<8xf32>
    %12 = vector.shape_cast %11 : vector<8xf32> to vector<8x1xf32>
    %cst_8 = arith.constant 1.000000e-24 : f32
    %13 = vector.broadcast %cst_8 : f32 to vector<8x1xf32>
    %14 = arith.maximumf %12, %13 : vector<8x1xf32>
    %15 = math.rsqrt %14 : vector<8x1xf32>
    %16 = vector.broadcast %15 : vector<8x1xf32> to vector<8x32xf32>
    %17 = arith.mulf %9, %16 : vector<8x32xf32>
    %18 = arith.truncf %17 : vector<8x32xf32> to vector<8x32xbf16>
    %cst_9 = arith.constant dense<0.000000e+00> : vector<8x8xf32>
    %19 = tpu.matmul %8, %18, %cst_9 {dimension_numbers = #tpu.dot_dimension_numbers<[1], [1], [0], [0], [0, 0, 1, 0], [], []>} : vector<8x32xbf16>, vector<8x32xbf16>, vector<8x8xf32> -> vector<8x8xf32>
    %c0_i32_10 = arith.constant 0 : i32
    %20 = arith.cmpi eq, %arg1, %c0_i32_10 : i32
    %21 = arith.extui %20 : i1 to i32
    %c0_i32_11 = arith.constant 0 : i32
    %22 = arith.cmpi ne, %21, %c0_i32_11 : i32
    scf.if %22 {
      %cst_42 = arith.constant -1.000000e+30 : f32
      %82 = vector.broadcast %cst_42 : f32 to vector<8x1xf32>
      %c0_43 = arith.constant 0 : index
      %c0_44 = arith.constant 0 : index
      %83 = vector.load %arg7[%c0_43, %c0_44] : memref<8x1xf32, #tpu.memory_space<vmem>>, vector<8x1xf32>
      tpu.vector_store %arg7[%c0_43, %c0_44], %82 {strides = array<i32>} : memref<8x1xf32, #tpu.memory_space<vmem>>, vector<8x1xf32>,
      %cst_45 = arith.constant 0.000000e+00 : f32
      %84 = vector.broadcast %cst_45 : f32 to vector<8x1xf32>
      %c0_46 = arith.constant 0 : index
      %c0_47 = arith.constant 0 : index
      %85 = vector.load %arg8[%c0_46, %c0_47] : memref<8x1xf32, #tpu.memory_space<vmem>>, vector<8x1xf32>
      tpu.vector_store %arg8[%c0_46, %c0_47], %84 {strides = array<i32>} : memref<8x1xf32, #tpu.memory_space<vmem>>, vector<8x1xf32>,
    } else {
    }
    %c0_12 = arith.constant 0 : index
    %c0_13 = arith.constant 0 : index
    %23 = vector.load %arg7[%c0_12, %c0_13] : memref<8x1xf32, #tpu.memory_space<vmem>>, vector<8x1xf32>
    %cst_14 = arith.constant dense<0xFF800000> : vector<8xf32>
    %24 = vector.multi_reduction <maximumf>, %19, %cst_14 [1] : vector<8x8xf32> to vector<8xf32>
    %25 = vector.shape_cast %24 : vector<8xf32> to vector<8x1xf32>
    %26 = arith.maximumf %23, %25 : vector<8x1xf32>
    %27 = arith.subf %23, %26 : vector<8x1xf32>
    %28 = math.exp %27 : vector<8x1xf32>
    %c0_15 = arith.constant 0 : index
    %c0_16 = arith.constant 0 : index
    %29 = vector.load %arg8[%c0_15, %c0_16] : memref<8x1xf32, #tpu.memory_space<vmem>>, vector<8x1xf32>
    %30 = arith.mulf %28, %29 : vector<8x1xf32>
    %31 = vector.broadcast %26 : vector<8x1xf32> to vector<8x8xf32>
    %32 = arith.subf %19, %31 : vector<8x8xf32>
    %33 = math.exp %32 : vector<8x8xf32>
    %cst_17 = arith.constant dense<0.000000e+00> : vector<8xf32>
    %34 = vector.multi_reduction <add>, %33, %cst_17 [1] : vector<8x8xf32> to vector<8xf32>
    %35 = vector.shape_cast %34 : vector<8xf32> to vector<8x1xf32>
    %36 = arith.addf %30, %35 : vector<8x1xf32>
    %c0_18 = arith.constant 0 : index
    %c0_19 = arith.constant 0 : index
    %37 = vector.load %arg8[%c0_18, %c0_19] : memref<8x1xf32, #tpu.memory_space<vmem>>, vector<8x1xf32>
    tpu.vector_store %arg8[%c0_18, %c0_19], %36 {strides = array<i32>} : memref<8x1xf32, #tpu.memory_space<vmem>>, vector<8x1xf32>,
    %c0_20 = arith.constant 0 : index
    %c0_21 = arith.constant 0 : index
    %38 = vector.load %arg7[%c0_20, %c0_21] : memref<8x1xf32, #tpu.memory_space<vmem>>, vector<8x1xf32>
    tpu.vector_store %arg7[%c0_20, %c0_21], %26 {strides = array<i32>} : memref<8x1xf32, #tpu.memory_space<vmem>>, vector<8x1xf32>,
    %c0_i32_22 = arith.constant 0 : i32
    %39 = arith.cmpi eq, %arg0, %c0_i32_22 : i32
    %40 = arith.extui %39 : i1 to i32
    %c0_i32_23 = arith.constant 0 : i32
    %41 = arith.cmpi ne, %40, %c0_i32_23 : i32
    scf.if %41 {
      %cst_42 = arith.constant -1.000000e+30 : f32
      %82 = vector.broadcast %cst_42 : f32 to vector<1x8xf32>
      %83 = arith.index_cast %arg1 : i32 to index
      %c0_43 = arith.constant 0 : index
      %c0_44 = arith.constant 0 : index
      %84 = vector.load %arg9[%83, %c0_43, %c0_44] : memref<1x1x8xf32, #tpu.memory_space<vmem>>, vector<1x1x8xf32>
      %85 = vector.shape_cast %84 : vector<1x1x8xf32> to vector<1x8xf32>
      %86 = vector.shape_cast %82 : vector<1x8xf32> to vector<1x1x8xf32>
      tpu.vector_store %arg9[%83, %c0_43, %c0_44], %86 {strides = array<i32>} : memref<1x1x8xf32, #tpu.memory_space<vmem>>, vector<1x1x8xf32>,
      %cst_45 = arith.constant 0.000000e+00 : f32
      %87 = vector.broadcast %cst_45 : f32 to vector<1x8xf32>
      %88 = arith.index_cast %arg1 : i32 to index
      %c0_46 = arith.constant 0 : index
      %c0_47 = arith.constant 0 : index
      %89 = vector.load %arg10[%88, %c0_46, %c0_47] : memref<1x1x8xf32, #tpu.memory_space<vmem>>, vector<1x1x8xf32>
      %90 = vector.shape_cast %89 : vector<1x1x8xf32> to vector<1x8xf32>
      %91 = vector.shape_cast %87 : vector<1x8xf32> to vector<1x1x8xf32>
      tpu.vector_store %arg10[%88, %c0_46, %c0_47], %91 {strides = array<i32>} : memref<1x1x8xf32, #tpu.memory_space<vmem>>, vector<1x1x8xf32>,
    } else {
    }
    %42 = arith.index_cast %arg1 : i32 to index
    %c0_24 = arith.constant 0 : index
    %c0_25 = arith.constant 0 : index
    %43 = vector.load %arg9[%42, %c0_24, %c0_25] : memref<1x1x8xf32, #tpu.memory_space<vmem>>, vector<1x1x8xf32>
    %44 = vector.shape_cast %43 : vector<1x1x8xf32> to vector<1x8xf32>
    %cst_26 = arith.constant dense<0xFF800000> : vector<8xf32>
    %45 = vector.multi_reduction <maximumf>, %19, %cst_26 [0] : vector<8x8xf32> to vector<8xf32>
    %46 = vector.shape_cast %45 : vector<8xf32> to vector<1x8xf32>
    %47 = arith.maximumf %44, %46 : vector<1x8xf32>
    %48 = arith.subf %44, %47 : vector<1x8xf32>
    %49 = math.exp %48 : vector<1x8xf32>
    %50 = arith.index_cast %arg1 : i32 to index
    %c0_27 = arith.constant 0 : index
    %c0_28 = arith.constant 0 : index
    %51 = vector.load %arg10[%50, %c0_27, %c0_28] : memref<1x1x8xf32, #tpu.memory_space<vmem>>, vector<1x1x8xf32>
    %52 = vector.shape_cast %51 : vector<1x1x8xf32> to vector<1x8xf32>
    %53 = arith.mulf %49, %52 : vector<1x8xf32>
    %54 = vector.broadcast %47 : vector<1x8xf32> to vector<8x8xf32>
    %55 = arith.subf %19, %54 : vector<8x8xf32>
    %56 = math.exp %55 : vector<8x8xf32>
    %cst_29 = arith.constant dense<0.000000e+00> : vector<8xf32>
    %57 = vector.multi_reduction <add>, %56, %cst_29 [0] : vector<8x8xf32> to vector<8xf32>
    %58 = vector.shape_cast %57 : vector<8xf32> to vector<1x8xf32>
    %59 = arith.addf %53, %58 : vector<1x8xf32>
    %60 = arith.index_cast %arg1 : i32 to index
    %c0_30 = arith.constant 0 : index
    %c0_31 = arith.constant 0 : index
    %61 = vector.load %arg10[%60, %c0_30, %c0_31] : memref<1x1x8xf32, #tpu.memory_space<vmem>>, vector<1x1x8xf32>
    %62 = vector.shape_cast %61 : vector<1x1x8xf32> to vector<1x8xf32>
    %63 = vector.shape_cast %59 : vector<1x8xf32> to vector<1x1x8xf32>
    tpu.vector_store %arg10[%60, %c0_30, %c0_31], %63 {strides = array<i32>} : memref<1x1x8xf32, #tpu.memory_space<vmem>>, vector<1x1x8xf32>,
    %64 = arith.index_cast %arg1 : i32 to index
    %c0_32 = arith.constant 0 : index
    %c0_33 = arith.constant 0 : index
    %65 = vector.load %arg9[%64, %c0_32, %c0_33] : memref<1x1x8xf32, #tpu.memory_space<vmem>>, vector<1x1x8xf32>
    %66 = vector.shape_cast %65 : vector<1x1x8xf32> to vector<1x8xf32>
    %67 = vector.shape_cast %47 : vector<1x8xf32> to vector<1x1x8xf32>
    tpu.vector_store %arg9[%64, %c0_32, %c0_33], %67 {strides = array<i32>} : memref<1x1x8xf32, #tpu.memory_space<vmem>>, vector<1x1x8xf32>,
    %68 = arith.cmpi eq, %arg0, %arg1 : i32
    %69 = arith.extui %68 : i1 to i32
    %c0_i32_34 = arith.constant 0 : i32
    %70 = arith.cmpi ne, %69, %c0_i32_34 : i32
    scf.if %70 {
      %82 = arith.extf %8 : vector<8x32xbf16> to vector<8x32xf32>
      %83 = arith.extf %18 : vector<8x32xbf16> to vector<8x32xf32>
      %84 = arith.mulf %82, %83 : vector<8x32xf32>
      %cst_42 = arith.constant dense<0.000000e+00> : vector<8xf32>
      %85 = vector.multi_reduction <add>, %84, %cst_42 [1] : vector<8x32xf32> to vector<8xf32>
      %86 = vector.shape_cast %85 : vector<8xf32> to vector<8x1xf32>
      %c0_43 = arith.constant 0 : index
      %87 = memref.load %arg5[%c0_43] : memref<1xf32, #tpu.memory_space<smem>>
      %88 = vector.shape_cast %86 : vector<8x1xf32> to vector<1x8x1xf32>
      %cst_44 = arith.constant dense<0.000000e+00> : vector<1xf32>
      %89 = vector.multi_reduction <add>, %88, %cst_44 [1, 2] : vector<1x8x1xf32> to vector<1xf32>
      %90 = vector.shape_cast %89 : vector<1xf32> to vector<1x1x1xf32>
      %91 = vector.extract %90[0, 0, 0] : f32 from vector<1x1x1xf32>
      %cst_45 = arith.constant 2.000000e+00 : f32
      %92 = arith.mulf %cst_45, %91 : f32
      %93 = arith.subf %87, %92 : f32
      %c0_46 = arith.constant 0 : index
      %94 = memref.load %arg5[%c0_46] : memref<1xf32, #tpu.memory_space<smem>>
      memref.store %93, %arg5[%c0_46] : memref<1xf32, #tpu.memory_space<smem>>
    } else {
    }
    %c0_i32_35 = arith.constant 0 : i32
    %71 = arith.cmpi eq, %arg1, %c0_i32_35 : i32
    %72 = arith.extui %71 : i1 to i32
    %c0_i32_36 = arith.constant 0 : i32
    %73 = arith.cmpi ne, %72, %c0_i32_36 : i32
    scf.if %73 {
      %c0_42 = arith.constant 0 : index
      %c0_43 = arith.constant 0 : index
      %82 = vector.load %arg7[%c0_42, %c0_43] : memref<8x1xf32, #tpu.memory_space<vmem>>, vector<8x1xf32>
      %c0_44 = arith.constant 0 : index
      %c0_45 = arith.constant 0 : index
      %83 = vector.load %arg8[%c0_44, %c0_45] : memref<8x1xf32, #tpu.memory_space<vmem>>, vector<8x1xf32>
      %84 = math.log %83 : vector<8x1xf32>
      %85 = arith.addf %82, %84 : vector<8x1xf32>
      %c0_46 = arith.constant 0 : index
      %86 = memref.load %arg5[%c0_46] : memref<1xf32, #tpu.memory_space<smem>>
      %87 = vector.shape_cast %85 : vector<8x1xf32> to vector<1x8x1xf32>
      %cst_47 = arith.constant dense<0.000000e+00> : vector<1xf32>
      %88 = vector.multi_reduction <add>, %87, %cst_47 [1, 2] : vector<1x8x1xf32> to vector<1xf32>
      %89 = vector.shape_cast %88 : vector<1xf32> to vector<1x1x1xf32>
      %90 = vector.extract %89[0, 0, 0] : f32 from vector<1x1x1xf32>
      %91 = arith.addf %86, %90 : f32
      %c0_48 = arith.constant 0 : index
      %92 = memref.load %arg5[%c0_48] : memref<1xf32, #tpu.memory_space<smem>>
      memref.store %91, %arg5[%c0_48] : memref<1xf32, #tpu.memory_space<smem>>
    } else {
    }
    %c0_i32_37 = arith.constant 0 : i32
    %74 = arith.cmpi eq, %arg0, %c0_i32_37 : i32
    %75 = arith.extui %74 : i1 to i32
    %c0_i32_38 = arith.constant 0 : i32
    %76 = arith.cmpi ne, %75, %c0_i32_38 : i32
    scf.if %76 {
      %82 = arith.index_cast %arg1 : i32 to index
      %c0_42 = arith.constant 0 : index
      %c0_43 = arith.constant 0 : index
      %83 = vector.load %arg9[%82, %c0_42, %c0_43] : memref<1x1x8xf32, #tpu.memory_space<vmem>>, vector<1x1x8xf32>
      %84 = vector.shape_cast %83 : vector<1x1x8xf32> to vector<1x8xf32>
      %85 = arith.index_cast %arg1 : i32 to index
      %c0_44 = arith.constant 0 : index
      %c0_45 = arith.constant 0 : index
      %86 = vector.load %arg10[%85, %c0_44, %c0_45] : memref<1x1x8xf32, #tpu.memory_space<vmem>>, vector<1x1x8xf32>
      %87 = vector.shape_cast %86 : vector<1x1x8xf32> to vector<1x8xf32>
      %88 = math.log %87 : vector<1x8xf32>
      %89 = arith.addf %84, %88 : vector<1x8xf32>
      %c0_46 = arith.constant 0 : index
      %90 = memref.load %arg5[%c0_46] : memref<1xf32, #tpu.memory_space<smem>>
      %91 = vector.shape_cast %89 : vector<1x8xf32> to vector<1x1x8xf32>
      %cst_47 = arith.constant dense<0.000000e+00> : vector<1xf32>
      %92 = vector.multi_reduction <add>, %91, %cst_47 [1, 2] : vector<1x1x8xf32> to vector<1xf32>
      %93 = vector.shape_cast %92 : vector<1xf32> to vector<1x1x1xf32>
      %94 = vector.extract %93[0, 0, 0] : f32 from vector<1x1x1xf32>
      %95 = arith.addf %90, %94 : f32
      %c0_48 = arith.constant 0 : index
      %96 = memref.load %arg5[%c0_48] : memref<1xf32, #tpu.memory_space<smem>>
      memref.store %95, %arg5[%c0_48] : memref<1xf32, #tpu.memory_space<smem>>
    } else {
    }
    %c0_i32_39 = arith.constant 0 : i32
    %77 = arith.cmpi eq, %arg0, %c0_i32_39 : i32
    %c0_i32_40 = arith.constant 0 : i32
    %78 = arith.cmpi eq, %arg1, %c0_i32_40 : i32
    %79 = arith.andi %77, %78 : i1
    %80 = arith.extui %79 : i1 to i32
    %c0_i32_41 = arith.constant 0 : i32
    %81 = arith.cmpi ne, %80, %c0_i32_41 : i32
    scf.if %81 {
      %c0_42 = arith.constant 0 : index
      %82 = memref.load %arg5[%c0_42] : memref<1xf32, #tpu.memory_space<smem>>
      %cst_43 = arith.constant 8.000000e+00 : f32
      %83 = arith.divf %82, %cst_43 : f32
      %c0_44 = arith.constant 0 : index
      %84 = memref.load %arg4[%c0_44] : memref<1xf32, #tpu.memory_space<smem>>
      memref.store %83, %arg4[%c0_44] : memref<1xf32, #tpu.memory_space<smem>>
    } else {
    }
    return
  }
  func.func @transform_0(%arg0: i32, %arg1: i32) -> (i32, i32) {
    %c0_i32 = arith.constant 0 : i32
    %c0_i32_0 = arith.constant 0 : i32
    return %arg0, %c0_i32 : i32, i32
  }
  func.func @transform_1(%arg0: i32, %arg1: i32) -> (i32, i32) {
    %c0_i32 = arith.constant 0 : i32
    %c0_i32_0 = arith.constant 0 : i32
    return %arg1, %c0_i32 : i32, i32
  }
  func.func @transform_2(%arg0: i32, %arg1: i32) -> i32 {
    %c0_i32 = arith.constant 0 : i32
    %c0_i32_0 = arith.constant 0 : i32
    return %c0_i32 : i32
  }
}

</mosaic_0001>

<llo_original>
// kernel: tpu_custom_call.1
$region0: #{tpu_custom_call.1}
  #allocation0 [shape = 'u32[]', space=smem, size = 0x4, offset = 0x4, fixed_abs, tag = 'smem constant byte address 0x4 - core index']
  #allocation1 [shape = 'u32[144,128]{1,0:T(1,128)}', space=vmem, size = 0x12000, scoped, tag = 'internal scratch']
  #allocation2 [shape = 'f32[1]{0:T(128)}', space=smem, size = 0x200, scoped, tag = 'scratch operand']
  #allocation3 [shape = 'bf16[8,32]{1,0:T(8,128)(2,1)}', space=vmem, size = 0x800, scoped, tag = 'scratch operand']
  #allocation4 [shape = 'f32[8,1]{1,0:T(8,128)}', space=vmem, size = 0x1000, scoped, tag = 'scratch operand']
  #allocation5 [shape = 'f32[8,1]{1,0:T(8,128)}', space=vmem, size = 0x1000, scoped, tag = 'scratch operand']
  #allocation6 [shape = 'f32[1,1,8]{2,1,0:T(1,128)}', space=vmem, size = 0x200, scoped, tag = 'scratch operand']
  #allocation7 [shape = 'f32[1,1,8]{2,1,0:T(1,128)}', space=vmem, size = 0x200, scoped, tag = 'scratch operand']
  %s0 = inlined_call_operand.hbm [shape: f32[8,32], index: 0, kind: input, shape index: {}]
  %s1 = inlined_call_operand.hbm [shape: f32[8,32], index: 1, kind: input, shape index: {}]
  %s2 = inlined_call_operand.hbm [shape: f32[1], index: 2, kind: output, shape index: {}]
  %s3 = sld [smem:[#allocation0]]
  $region58: #{tpu_custom_call.1} parent=0
    _
  %s5 = ssub.s32 1, %s3
  %s6 = scalar_select 0, %s5, %s3
  $region1: #{tpu_custom_call.1} parent=0
    #allocation8 [shape = 'u8[4096]{0}', space=vmem, size = 0x1000, scoped, tag = 'input window, operand 0, single buffered']
    #allocation9 [shape = 's32[1]{0}', space=sflag, size = 0x4, scoped, tag = 'scoped memory for tpu_custom_call.1']
    #allocation10 [shape = 's32[1]{0}', space=sflag, size = 0x4, scoped, tag = 'scoped memory for tpu_custom_call.1']
    #allocation11 [shape = 'u8[4096]{0}', space=vmem, size = 0x1000, scoped, tag = 'input window, operand 1, single buffered']
    #allocation12 [shape = 's32[1]{0}', space=sflag, size = 0x4, scoped, tag = 'scoped memory for tpu_custom_call.1']
    #allocation13 [shape = 'u8[512]{0}', space=smem, size = 0x200, scoped, tag = 'output window, operand 0, single buffered']
    %7 = vsyncpa [#allocation9], 0
    %8 = vsyncpa [#allocation12], 0
    %9 = vsyncpa [#allocation10], 0
    // Predicated region
    $region2: #{tpu_custom_call.1} parent=1 // pred_check
      _
    $region3: #{tpu_custom_call.1} parent=1 // pred_check_branch
      %11 = sbr.rel (0) target = $region5
    $region4: #{tpu_custom_call.1} parent=1 // pred_region
      %s13 = ssub.s32 128, 128
      %14 = vsyncadd [#allocation9], %s13
      %s16 = sshll.u32 [#allocation8], 4
      %s17 = int_to_ptr.vmem [resolvable:$true] %s16
      %19 = dma.hbm_to_vmem [thread:$0]  %s0, 128, %s17, [#allocation9]
    $region5: #{tpu_custom_call.1} parent=1 // pred_fallthru
      _
    // Predicated region
    $region6: #{tpu_custom_call.1} parent=1 // pred_check
      _
    $region7: #{tpu_custom_call.1} parent=1 // pred_check_branch
      %21 = sbr.rel (0) target = $region9
    $region8: #{tpu_custom_call.1} parent=1 // pred_region
      %s23 = ssub.s32 128, 128
      %24 = vsyncadd [#allocation12], %s23
      %s26 = sshll.u32 [#allocation11], 4
      %s27 = int_to_ptr.vmem [resolvable:$true] %s26
      %29 = dma.hbm_to_vmem [thread:$0]  %s1, 128, %s27, [#allocation12]
    $region9: #{tpu_custom_call.1} parent=1 // pred_fallthru
      _
    // Predicated region
    $region10: #{tpu_custom_call.1} parent=1 // pred_check
      _
    $region11: #{tpu_custom_call.1} parent=1 // pred_check_branch
      %31 = sbr.rel (0) target = $region13
    $region12: #{tpu_custom_call.1} parent=1 // pred_region
      %32 = dma.done [#allocation9], 128
    $region13: #{tpu_custom_call.1} parent=1 // pred_fallthru
      _
    // Predicated region
    $region14: #{tpu_custom_call.1} parent=1 // pred_check
      _
    $region15: #{tpu_custom_call.1} parent=1 // pred_check_branch
      %34 = sbr.rel (0) target = $region17
    $region16: #{tpu_custom_call.1} parent=1 // pred_region
      %35 = dma.done [#allocation12], 128
    $region17: #{tpu_custom_call.1} parent=1 // pred_fallthru
      _
    %p37 = scmp.eq.s32.totalorder 0, 0
    %p38 = scmp.eq.s32.totalorder 0, 0
    %p39 = pnand %p37, %p38
    %p40 = pneg %p39
    // Predicated region
    $region18: #{tpu_custom_call.1} parent=1 // pred_check
      _
    $region19: #{tpu_custom_call.1} parent=1 // pred_check_branch
      %42 = sbr.rel (%p39) target = $region21
    $region20: #{tpu_custom_call.1} parent=1 // pred_region
      %s43 = scalar_lea.smem [#allocation2], 0
      %44 = sst [smem:[%s43]] 0.0
    $region21: #{tpu_custom_call.1} parent=1 // pred_fallthru
      _
    // Predicated region
    $region22: #{tpu_custom_call.1} parent=1 // pred_check
      %p45 = pneg %p38
    $region23: #{tpu_custom_call.1} parent=1 // pred_check_branch
      %47 = sbr.rel (%p45) target = $region25
    $region24: #{tpu_custom_call.1} parent=1 // pred_region
      %v48 = vld [vmem:[#allocation8] sm:$0xff]
      %v49 = vmul.f32 %v48, %v48
      %vm50 = vcmask 261120
      %v51 = vsel %vm50, %v49, 0.0
      %52 = vadd.xlane.f32.xlu0 %v51
      %v53 = vpop.xlane.xlu0 %52
      %v54 = vmax.f32 %v53, 1e-24
      %v55 = vrsqrt.pop %v54
      %v56 = vmul.f32 %v55, 10.0
      %v57 = vmul.f32 %v48, %v56
      %v58 = vpack.c.bf16 %v57, %v57
      %vm59 = vcmask 257024
      %60 = vst.msk [vmem:[#allocation3] sm:$0xf] %vm59, %v58
    $region25: #{tpu_custom_call.1} parent=1 // pred_fallthru
      _
    %v61 = vld [vmem:[#allocation3] sm:$0xf]
    %v62 = vld [vmem:[#allocation11] sm:$0xff]
    %v63 = vmul.f32 %v62, %v62
    %vm64 = vcmask 261120
    %v65 = vsel %vm64, %v63, 0.0
    %66 = vadd.xlane.f32.xlu0 %v65
    %v67 = vpop.xlane.xlu0 %66
    %v68 = vmax.f32 %v67, 1e-24
    %v69 = vrsqrt.pop %v68
    %v70 = vmul.f32 %v62, %v69
    %v71 = vpack.c.bf16 %v70, %v70
    %v73 = vsel %vm64, %v61, 0
    %v76 = vsel %vm64, %v71, 0
    %78 = vmatprep.subr.bf16.mxu0 0
    %79 = vmatpush1.bf16.xpose.msra.mxu0 %v76
    %80 = vmatprep.subr.bf16.mxu0 0
    %81 = vmatpush1.bf16.xpose.msra.mxu0 0
    %82 = vmatprep.subr.bf16.mxu0 0
    %83 = vmatpush1.bf16.xpose.msra.mxu0 0
    %84 = vmatprep.subr.bf16.mxu0 0
    %85 = vmatpush1.bf16.xpose.msra.mxu0 0
    %86 = vmatprep.subr.bf16.mxu0 0
    %87 = vmatpush1.bf16.xpose.msra.mxu0 0
    %88 = vmatprep.subr.bf16.mxu0 0
    %89 = vmatpush1.bf16.xpose.msra.mxu0 0
    %90 = vmatprep.subr.bf16.mxu0 0
    %91 = vmatpush1.bf16.xpose.msra.mxu0 0
    %92 = vmatprep.subr.bf16.mxu0 0
    %93 = vmatpush1.bf16.xpose.msra.mxu0 0
    %94 = vmatprep.subr.bf16.mxu0 0
    %95 = vmatpush1.bf16.xpose.msra.mxu0 0
    %96 = vmatprep.subr.bf16.mxu0 0
    %97 = vmatpush1.bf16.xpose.msra.mxu0 0
    %98 = vmatprep.subr.bf16.mxu0 0
    %99 = vmatpush1.bf16.xpose.msra.mxu0 0
    %100 = vmatprep.subr.bf16.mxu0 0
    %101 = vmatpush1.bf16.xpose.msra.mxu0 0
    %102 = vmatprep.subr.bf16.mxu0 0
    %103 = vmatpush1.bf16.xpose.msra.mxu0 0
    %104 = vmatprep.subr.bf16.mxu0 0
    %105 = vmatpush1.bf16.xpose.msra.mxu0 0
    %106 = vmatprep.subr.bf16.mxu0 0
    %107 = vmatpush1.bf16.xpose.msra.mxu0 0
    %108 = vmatprep.subr.bf16.mxu0 0
    %109 = vmatpush1.bf16.xpose.msra.mxu0 0
    %110 = vmatprep.mubr.bf16.mxu0 0
    %111 = vmatmul.mubr.bf16.gmra.mrb[0].mxu0 %v73
    %v112 = vpop.f32.mrb[0].mxu0
    %v113 = vadd.f32 0.0, %v112
    %v114 = vpop.f32.mrb[0].mxu0
    %v115 = vpop.f32.mrb[0].mxu0
    %v116 = vpop.f32.mrb[0].mxu0
    %117 = vdwg.mxu0
    // Predicated region
    $region26: #{tpu_custom_call.1} parent=1 // pred_check
      %p118 = pneg %p38
    $region27: #{tpu_custom_call.1} parent=1 // pred_check_branch
      %120 = sbr.rel (%p118) target = $region29
    $region28: #{tpu_custom_call.1} parent=1 // pred_region
      %vm121 = vcmask 7168
      %122 = vst.msk [vmem:[#allocation4] sm:$0xff] %vm121, -1e+30
      %123 = vst.msk [vmem:[#allocation5] sm:$0xff] %vm121, 0.0
    $region29: #{tpu_custom_call.1} parent=1 // pred_fallthru
      _
    %v124 = vld [vmem:[#allocation4] sm:$0xff]
    %vm125 = vcmask 64512
    %v126 = vsel %vm125, %v113, -inf
    %127 = vmax.xlane.f32.xlu0 %v126
    %v128 = vpop.xlane.xlu0 %127
    %v129 = vmax.f32 %v124, %v128
    %v130 = vsub.f32 %v124, %v129
    %v131 = vmul.f32 %v130, 1.442695
    %v132 = vpow.pop %v131
    %v133 = vld [vmem:[#allocation5] sm:$0xff]
    %v134 = vmul.f32 %v132, %v133
    %136 = vset.pattern.permute.xlu0 0
    %137 = vperm.xlu0 %136, %v129
    %v138 = vpop.permute.xlu0 %137
    %v140 = vsub.f32 %v113, %v138
    %v141 = vmul.f32 %v140, 1.442695
    %v142 = vpow.pop %v141
    %v143 = vsel %vm125, %v142, 0.0
    %144 = vadd.xlane.f32.xlu0 %v143
    %v145 = vpop.xlane.xlu0 %144
    %v146 = vadd.f32 %v134, %v145
    %vm147 = vcmask 7168
    %148 = vst.msk [vmem:[#allocation5] sm:$0xff] %vm147, %v146
    %149 = vst.msk [vmem:[#allocation4] sm:$0xff] %vm147, %v129
    // Predicated region
    $region30: #{tpu_custom_call.1} parent=1 // pred_check
      %p150 = pneg %p37
    $region31: #{tpu_custom_call.1} parent=1 // pred_check_branch
      %152 = sbr.rel (%p150) target = $region33
    $region32: #{tpu_custom_call.1} parent=1 // pred_region
      %vm153 = vcmask 57344
      %154 = vst.msk [vmem:[#allocation6] sm:$0x1] %vm153, -1e+30
      %155 = vst.msk [vmem:[#allocation7] sm:$0x1] %vm153, 0.0
    $region33: #{tpu_custom_call.1} parent=1 // pred_fallthru
      _
    %v156 = vld [vmem:[#allocation6] sm:$0x1]
    %v157 = vrot.slane %v126, 4
    %v158 = vmax.f32 %v126, %v157
    %v159 = vrot.slane %v158, 2
    %v160 = vmax.f32 %v158, %v159
    %v161 = vrot.slane %v160, 1
    %v162 = vmax.f32 %v160, %v161
    %v163 = vmax.f32 %v156, %v162
    %v164 = vsub.f32 %v156, %v163
    %v165 = vmul.f32 %v164, 1.442695
    %v166 = vpow.pop %v165
    %v167 = vld [vmem:[#allocation7] sm:$0x1]
    %v168 = vmul.f32 %v166, %v167
    %v170 = vlaneseq
    %v171 = vshrl.u32 %v170, 7
    %v172 = vsub.s32 0, %v171
    %v173 = vrot.slane %v163, %v172
    %v175 = vsub.f32 %v113, %v173
    %v176 = vmul.f32 %v175, 1.442695
    %v177 = vpow.pop %v176
    %v178 = vsel %vm125, %v177, 0.0
    %v179 = vrot.slane %v178, 4
    %v180 = vadd.f32 %v178, %v179
    %v181 = vrot.slane %v180, 2
    %v182 = vadd.f32 %v180, %v181
    %v183 = vrot.slane %v182, 1
    %v184 = vadd.f32 %v182, %v183
    %v185 = vadd.f32 %v168, %v184
    %vm186 = vcmask 57344
    %187 = vst.msk [vmem:[#allocation7] sm:$0x1] %vm186, %v185
    %188 = vst.msk [vmem:[#allocation6] sm:$0x1] %vm186, %v163
    %p189 = scmp.eq.s32.totalorder 0, 0
    // Predicated region
    $region34: #{tpu_custom_call.1} parent=1 // pred_check
      %p190 = pneg %p189
    $region35: #{tpu_custom_call.1} parent=1 // pred_check_branch
      %192 = sbr.rel (%p190) target = $region37
    $region36: #{tpu_custom_call.1} parent=1 // pred_region
      %v193 = vunpack.c.l.bf16 %v61
      %v194 = vunpack.c.l.bf16 %v71
      %v195 = vmul.f32 %v193, %v194
      %v196 = vsel %vm64, %v195, 0.0
      %197 = vadd.xlane.f32.xlu0 %v196
      %v198 = vpop.xlane.xlu0 %197
      %s199 = sld [smem:[#allocation2]]
      %v200 = vsel %vm147, %v198, 0.0
      %201 = vadd.xlane.f32.xlu0 %v200
      %v202 = vpop.xlane.xlu0 %201
      %v203 = vrot.slane %v202, 4
      %v204 = vadd.f32 %v202, %v203
      %v205 = vrot.slane %v204, 2
      %v206 = vadd.f32 %v204, %v205
      %v207 = vrot.slane %v206, 1
      %v208 = vadd.f32 %v206, %v207
      %s209 = vtos %v208
      %s210 = smul.f32 %s209, 2.0
      %s211 = ssub.f32 %s199, %s210
      %s212 = scalar_lea.smem [#allocation2], 0
      %213 = sst [smem:[%s212]] %s211
    $region37: #{tpu_custom_call.1} parent=1 // pred_fallthru
      _
    // Predicated region
    $region38: #{tpu_custom_call.1} parent=1 // pred_check
      %p214 = pneg %p38
    $region39: #{tpu_custom_call.1} parent=1 // pred_check_branch
      %216 = sbr.rel (%p214) target = $region41
    $region40: #{tpu_custom_call.1} parent=1 // pred_region
      %v217 = vld [vmem:[#allocation4] sm:$0xff]
      %v218 = vld [vmem:[#allocation5] sm:$0xff]
      %v219 = vlog2.pop %v218
      %v220 = vmul.f32 %v219, 0.6931472
      %v221 = vadd.f32 %v217, %v220
      %s222 = sld [smem:[#allocation2]]
      %v223 = vsel %vm147, %v221, 0.0
      %224 = vadd.xlane.f32.xlu0 %v223
      %v225 = vpop.xlane.xlu0 %224
      %v226 = vrot.slane %v225, 4
      %v227 = vadd.f32 %v225, %v226
      %v228 = vrot.slane %v227, 2
      %v229 = vadd.f32 %v227, %v228
      %v230 = vrot.slane %v229, 1
      %v231 = vadd.f32 %v229, %v230
      %s232 = vtos %v231
      %s233 = sadd.f32 %s222, %s232
      %s234 = scalar_lea.smem [#allocation2], 0
      %235 = sst [smem:[%s234]] %s233
    $region41: #{tpu_custom_call.1} parent=1 // pred_fallthru
      _
    // Predicated region
    $region42: #{tpu_custom_call.1} parent=1 // pred_check
      %p236 = pneg %p37
    $region43: #{tpu_custom_call.1} parent=1 // pred_check_branch
      %238 = sbr.rel (%p236) target = $region45
    $region44: #{tpu_custom_call.1} parent=1 // pred_region
      %v239 = vld [vmem:[#allocation6] sm:$0x1]
      %v240 = vld [vmem:[#allocation7] sm:$0x1]
      %v241 = vlog2.pop %v240
      %v242 = vmul.f32 %v241, 0.6931472
      %v243 = vadd.f32 %v239, %v242
      %s244 = sld [smem:[#allocation2]]
      %v245 = vsel %vm186, %v243, 0.0
      %246 = vadd.xlane.f32.xlu0 %v245
      %v247 = vpop.xlane.xlu0 %246
      %v248 = vrot.slane %v247, 4
      %v249 = vadd.f32 %v247, %v248
      %v250 = vrot.slane %v249, 2
      %v251 = vadd.f32 %v249, %v250
      %v252 = vrot.slane %v251, 1
      %v253 = vadd.f32 %v251, %v252
      %s254 = vtos %v253
      %s255 = sadd.f32 %s244, %s254
      %s256 = scalar_lea.smem [#allocation2], 0
      %257 = sst [smem:[%s256]] %s255
    $region45: #{tpu_custom_call.1} parent=1 // pred_fallthru
      _
    // Predicated region
    $region46: #{tpu_custom_call.1} parent=1 // pred_check
      _
    $region47: #{tpu_custom_call.1} parent=1 // pred_check_branch
      %259 = sbr.rel (%p39) target = $region49
    $region48: #{tpu_custom_call.1} parent=1 // pred_region
      %s260 = sld [smem:[#allocation2]]
      %v261 = vrcp.pop 8.0
      %s262 = vtos %v261
      %s263 = smul.f32 %s260, %s262
      %s264 = scalar_lea.smem [#allocation13], 0
      %265 = sst [smem:[%s264]] %s263
    $region49: #{tpu_custom_call.1} parent=1 // pred_fallthru
      _
    // Predicated region
    $region50: #{tpu_custom_call.1} parent=1 // pred_check
      _
    $region51: #{tpu_custom_call.1} parent=1 // pred_check_branch
      %267 = sbr.rel (0) target = $region53
    $region52: #{tpu_custom_call.1} parent=1 // pred_region
      %s269 = ssub.s32 16, 16
      %270 = vsyncadd [#allocation10], %s269
      %273 = dma.smem_to_hbm [#allocation13], 16, %s2, [#allocation10]
    $region53: #{tpu_custom_call.1} parent=1 // pred_fallthru
      _
    // Predicated region
    $region54: #{tpu_custom_call.1} parent=1 // pred_check
      _
    $region55: #{tpu_custom_call.1} parent=1 // pred_check_branch
      %275 = sbr.rel (0) target = $region57
    $region56: #{tpu_custom_call.1} parent=1 // pred_region
      %276 = dma.done [#allocation10], 16
    $region57: #{tpu_custom_call.1} parent=1 // pred_fallthru
      _
    %277 = sfence
    %278 = vsyncpa [#allocation9], 1
    %279 = vsyncpa [#allocation12], 1
    %280 = vsyncpa [#allocation10], 1

</llo_original>
